<compile_context>
chip_gen: v5e
topology: v5e:2x2
jax: 0.10.0
libtpu: 0.0.40
codegen_flags: <defaults>
</compile_context>

<pallas_src>
import jax
import jax.numpy as jnp
from jax.experimental import pallas as pl
from jax.experimental.pallas import tpu as pltpu

_LANE = 128
_SUBLANE_BF16 = 16   # bf16 packs 16 rows per vreg sublane group


def _round_up(x, m):
    return ((x + m - 1) // m) * m


def _pad2d(a, rows, cols):
    return jnp.pad(a, ((0, rows - a.shape[0]), (0, cols - a.shape[1])))


def _vmem_capacity_bytes():
    """Physical VMEM per core (v5e/v6e: 128 MiB, v7x: 64 MiB)."""
    try:
        info = pltpu.get_tpu_info()
        cap = int(getattr(info, "vmem_capacity_bytes", 0) or 0)
        if cap > 0:
            return cap
    except Exception:
        pass
    return 64 * 1024 * 1024      # conservative (v7x-sized) fallback


def _footprint_bytes(tm, tv, hp, fp, out_bytes, w1_bufs):
    """VMEM footprint of one pipelined grid step."""
    b = 0
    b += 2 * tm * hp * 2          # x tile, double-buffered, bf16
    b += w1_bufs * hp * fp * 2    # W1^T (grid-invariant)
    b += w1_bufs * fp * 4         # b1 (f32, grid-invariant)
    b += 2 * fp * tv * 2          # W2^T vocab tile, double-buffered, bf16
    b += 2 * tv * 4               # b2 vocab tile (f32)
    b += 2 * tm * tv * out_bytes  # output tile, double-buffered
    b += tm * fp * 2              # hidden-activation scratch (bf16)
    return b


def _pick_tiles(rows_p, vp, hp, fp, budget, out_bytes, w1_bufs):
    """Largest (row_tile, vocab_tile) that fit the VMEM budget.

    Larger row tiles are preferred: W2^T is re-streamed from HBM once per row
    tile, so row_tile is the dominant HBM-traffic lever (esp. v5e/v6e).  On a
    64 MiB (v7x) budget this naturally degrades to smaller tiles, which is the
    right trade there (HBM is 3.2 TB/s)."""
    row_cands = [t for t in (1024, 512, 256, 128, 64, 32, 16)
                 if t <= max(rows_p, _SUBLANE_BF16)]
    voc_cands = [t for t in (2048, 1024, 512, 256, 128)
                 if t <= max(vp, _LANE)]
    for tm in row_cands:
        for tv in voc_cands:
            if _footprint_bytes(tm, tv, hp, fp, out_bytes, w1_bufs) <= budget:
                return tm, tv
    return row_cands[-1], voc_cands[-1]


# ----------------------------------------------------------------------------
# Pallas kernel: fused 2-layer MLP head (weights already masked + transposed)
# ----------------------------------------------------------------------------
def _masked_mlp_kernel(x_ref, w1t_ref, b1_ref, w2t_ref, b2_ref, out_ref, h_ref):
    j = pl.program_id(1)  # vocab-tile index (inner, sequential, "arbitrary")

    # Compute the hidden activation once per row tile (vocab step 0); keep it
    # resident in a bf16 VMEM scratch for all subsequent vocab tiles.
    @pl.when(j == 0)
    def _():
        h = jnp.dot(x_ref[...], w1t_ref[...],
                    preferred_element_type=jnp.float32)       # [tm, Fp] f32
        h = jax.nn.gelu(h + b1_ref[...], approximate=True)    # f32 bias + GELU
        h_ref[...] = h.astype(h_ref.dtype)                    # bf16 for MXU

    # Second GEMM against the current vocab tile of W2^T.
    logits = jnp.dot(h_ref[...], w2t_ref[...],
                     preferred_element_type=jnp.float32)       # [tm, tv] f32
    out_ref[...] = (logits + b2_ref[...]).astype(out_ref.dtype)


def masked_mlp_forward(x, w1t, b1, w2t, b2, *, out_dtype=jnp.bfloat16):
    """x: [rows, Hp] bf16.  w1t: [Hp, Fp] bf16.  w2t: [Fp, Vp] bf16.
    b1: [1, Fp] f32.  b2: [1, Vp] f32.  Returns logits [rows, Vp] out_dtype."""
    rows, hp = x.shape
    fp = w1t.shape[1]
    vp = w2t.shape[1]
    assert hp % _LANE == 0 and fp % _LANE == 0 and vp % _LANE == 0

    x = x.astype(jnp.bfloat16)
    w1t = w1t.astype(jnp.bfloat16)
    w2t = w2t.astype(jnp.bfloat16)
    b1 = b1.astype(jnp.float32)
    b2 = b2.astype(jnp.float32)
    out_bytes = jnp.dtype(out_dtype).itemsize

    # Per-generation VMEM budget: ~75% of physical, leaving headroom for
    # compiler-internal scratch / semaphores (v7x: ~48 MiB, v5e/v6e: ~96 MiB).
    budget = (_vmem_capacity_bytes() * 3) // 4

    rows_p = _round_up(rows, _SUBLANE_BF16)
    row_tile, vocab_tile = _pick_tiles(rows_p, vp, hp, fp, budget,
                                       out_bytes, w1_bufs=1)

    # v7x shards the "parallel" row axis across 2 TensorCores: keep >= 2 row
    # tiles whenever there are enough rows so neither core sits idle.
    if rows_p >= 2 * _SUBLANE_BF16 and rows_p // row_tile < 2:
        row_tile = max(_SUBLANE_BF16,
                       ((rows_p // 2) // _SUBLANE_BF16) * _SUBLANE_BF16)

    rows_p = _round_up(rows_p, row_tile)
    if rows_p != rows:
        x = jnp.pad(x, ((0, rows_p - rows), (0, 0)))

    # Pad the vocab dim up to a multiple of the vocab tile.  (Never fall back
    # to a single full-V block: that is a VMEM cliff for realistic vocabs.)
    vp_t = _round_up(vp, vocab_tile)
    if vp_t != vp:
        w2t = jnp.pad(w2t, ((0, 0), (0, vp_t - vp)))
        b2 = jnp.pad(b2, ((0, 0), (0, vp_t - vp)))

    grid = (rows_p // row_tile, vp_t // vocab_tile)

    cost = pl.CostEstimate(
        flops=2 * rows_p * (hp * fp + fp * vp_t),
        transcendentals=rows_p * fp,
        bytes_accessed=(rows_p * hp * 2 + hp * fp * 2 + fp * 4
                        + grid[0] * (fp * vp_t * 2 + vp_t * 4)
                        + rows_p * vp_t * out_bytes),
    )

    def build_call(single_buffer_invariants):
        inv_kwargs = (dict(pipeline_mode=pl.Buffered(1))
                      if single_buffer_invariants else {})
        in_specs = [
            pl.BlockSpec((row_tile, hp), lambda i, j: (i, 0)),            # x
            pl.BlockSpec((hp, fp), lambda i, j: (0, 0), **inv_kwargs),    # W1^T
            pl.BlockSpec((1, fp), lambda i, j: (0, 0), **inv_kwargs),     # b1
            pl.BlockSpec((fp, vocab_tile), lambda i, j: (0, j)),          # W2^T
            pl.BlockSpec((1, vocab_tile), lambda i, j: (0, j)),           # b2
        ]
        out_spec = pl.BlockSpec((row_tile, vocab_tile), lambda i, j: (i, j))
        return pl.pallas_call(
            _masked_mlp_kernel,
            out_shape=jax.ShapeDtypeStruct((rows_p, vp_t), out_dtype),
            grid_spec=pltpu.PrefetchScalarGridSpec(
                num_scalar_prefetch=0,
                grid=grid,
                in_specs=in_specs,
                out_specs=out_spec,
                scratch_shapes=[pltpu.VMEM((row_tile, fp), jnp.bfloat16)]),
            compiler_params=pltpu.CompilerParams(
                dimension_semantics=("parallel", "arbitrary"),
                vmem_limit_bytes=int(budget)),
            cost_estimate=cost,
        )

    try:
        out = build_call(True)(x, w1t, b1, w2t, b2)
    except Exception:
        # Fallback if this JAX build rejects single-buffered pipeline_mode.
        out = build_call(False)(x, w1t, b1, w2t, b2)

    # TODO(synk): add a K-tiled (Fp) grid axis with an f32 accumulator scratch
    # for very large FFN dims (Fp >= ~8K) so VMEM is bounded independent of F.
    return out[:rows, :vp]


# ----------------------------------------------------------------------------
# MaskedGenerativeModel wrapper (JAX side)
# ----------------------------------------------------------------------------
class MaskedGenerativeModel:
    """Mirrors the PyTorch wrapper: masks selected params at construction,
    then forward() runs the wrapped LM head via the fused Pallas kernel."""

    def __init__(self, params, args, masks, complementary=False):
        self.mask_param_names = list(args["param_keys"])
        # deep-copy of masks (jnp arrays are immutable); optionally complement.
        self.masks = {n: (1.0 - m) if complementary else m
                      for n, m in masks.items()}

        p = dict(params)
        # __init__-time masking, exactly like the PyTorch module.
        for n in self.mask_param_names:
            p[n] = p[n] * self.masks[n]
        self.params = p

        h = p["fc1.weight"].shape[1]
        f = p["fc1.weight"].shape[0]
        v = p["fc2.weight"].shape[0]
        self.H, self.F, self.V = h, f, v
        hp, fp, vp = (_round_up(d, _LANE) for d in (h, f, v))
        self.Hp, self.Fp, self.Vp = hp, fp, vp

        # Pre-transpose to [in, out], pad to lane multiples, cast to bf16.
        self.w1t = _pad2d(p["fc1.weight"].T, hp, fp).astype(jnp.bfloat16)
        self.w2t = _pad2d(p["fc2.weight"].T, fp, vp).astype(jnp.bfloat16)
        self.b1 = jnp.pad(p["fc1.bias"], (0, fp - f)).reshape(1, fp).astype(
            jnp.float32)
        self.b2 = jnp.pad(p["fc2.bias"], (0, vp - v)).reshape(1, vp).astype(
            jnp.float32)
        # Embedding table padded on H so looked-up activations are lane-aligned.
        self.embed = jnp.pad(p["embed.weight"],
                             ((0, 0), (0, hp - h))).astype(jnp.bfloat16)

    def forward(self, input_ids):
        """input_ids: int32 [B, S] -> logits bfloat16 [B, S, V]."""
        B, S = input_ids.shape
        # TODO(synk): fuse this embedding gather into the kernel (scalar-
        # prefetched ids + per-row DMA gather) to save one activation
        # write+read of HBM; kept as XLA glue here.
        x = self.embed[input_ids]                    # [B, S, Hp] bf16
        x2d = x.reshape(B * S, self.Hp)
        logits = masked_mlp_forward(x2d, self.w1t, self.b1, self.w2t, self.b2,
                                    out_dtype=jnp.bfloat16)
        return logits[:, : self.V].reshape(B, S, self.V)

    # TODO(synk): `generate` (autoregressive decoding loop) is host-side
    # control-flow glue around repeated forward calls; not a kernel.


# ----------------------------------------------------------------------------
# Reference (pure JAX, mirrors the kernel's bf16 quantization of inputs)
# ----------------------------------------------------------------------------
def reference_forward(model, input_ids):
    x = model.embed[input_ids][..., : model.H].astype(jnp.float32)
    w1 = model.w1t[: model.H, : model.F].astype(jnp.float32)
    b1 = model.b1[0, : model.F]
    w2 = model.w2t[: model.F, : model.V].astype(jnp.float32)
    b2 = model.b2[0, : model.V]
    h = jax.nn.gelu(x @ w1 + b1, approximate=True)
    h = h.astype(jnp.bfloat16).astype(jnp.float32)   # kernel stores h in bf16
    return h @ w2 + b2


# ----------------------------------------------------------------------------
# Main
# ----------------------------------------------------------------------------
if __name__ == "__main__":
    B, S = 2, 8          # batch, sequence
    V = 32               # vocab size
    H = 32               # hidden (embedding) dim
    F = 64               # ffn dim

    key = jax.random.PRNGKey(0)
    k_emb, k_w1, k_b1, k_w2, k_b2, k_m1, k_m2, k_ids = jax.random.split(key, 8)

    params = {
        "embed.weight": jax.random.normal(k_emb, (V, H), jnp.float32) * 0.1,
        "fc1.weight":   jax.random.normal(k_w1, (F, H), jnp.float32) * 0.1,
        "fc1.bias":     jax.random.normal(k_b1, (F,), jnp.float32) * 0.01,
        "fc2.weight":   jax.random.normal(k_w2, (V, F), jnp.float32) * 0.1,
        "fc2.bias":     jax.random.normal(k_b2, (V,), jnp.float32) * 0.01,
    }
    masks = {
        "fc1.weight": jax.random.bernoulli(k_m1, 0.5, (F, H)).astype(jnp.float32),
        "fc2.weight": jax.random.bernoulli(k_m2, 0.5, (V, F)).astype(jnp.float32),
    }
    args = {"param_keys": ["fc1.weight", "fc2.weight"]}

    input_ids = jax.random.randint(k_ids, (B, S), 0, V, jnp.int32)

    model = MaskedGenerativeModel(params, args, masks, complementary=False)
    out = model.forward(input_ids)
    out = jax.block_until_ready(out)

    ref = reference_forward(model, input_ids)
    assert out.shape == (B, S, V), out.shape
    assert jnp.allclose(out.astype(jnp.float32), ref, atol=1e-2, rtol=1e-2), \
        "mismatch vs reference"

    print("KERNEL_OK")
</pallas_src>

<mosaic_0001>
module attributes {stable_mosaic.version = 11 : i64} {
  func.func @_masked_mlp_kernel(%arg0: i32, %arg1: i32, %arg2: memref<16x128xbf16, #tpu.memory_space<vmem>>, %arg3: memref<128x128xbf16, #tpu.memory_space<vmem>>, %arg4: memref<1x128xf32, #tpu.memory_space<vmem>>, %arg5: memref<128x128xbf16, #tpu.memory_space<vmem>>, %arg6: memref<1x128xf32, #tpu.memory_space<vmem>>, %arg7: memref<16x128xbf16, #tpu.memory_space<vmem>>, %arg8: memref<16x128xbf16, #tpu.memory_space<vmem>>) attributes {dimension_semantics = [#tpu.dimension_semantics<parallel>, #tpu.dimension_semantics<arbitrary>], iteration_bounds = array<i64: 1, 1>, scalar_prefetch = 0 : i64, scratch_operands = 1 : i64, tpu.core_type = #tpu.core_type<tc>, window_params = [{transform_indices = @transform_0, window_bounds = array<i64: 16, 128>}, {pipeline_mode = #tpu.pipeline_mode<synchronous>, transform_indices = @transform_1, window_bounds = array<i64: 128, 128>}, {pipeline_mode = #tpu.pipeline_mode<synchronous>, transform_indices = @transform_2, window_bounds = array<i64: 1, 128>}, {transform_indices = @transform_3, window_bounds = array<i64: 128, 128>}, {transform_indices = @transform_4, window_bounds = array<i64: 1, 128>}, {transform_indices = @transform_5, window_bounds = array<i64: 16, 128>}]} {
    %c0_i32 = arith.constant 0 : i32
    %0 = arith.cmpi eq, %arg1, %c0_i32 : i32
    %1 = arith.extui %0 : i1 to i32
    %c0_i32_0 = arith.constant 0 : i32
    %2 = arith.cmpi ne, %1, %c0_i32_0 : i32
    scf.if %2 {
      %c0_8 = arith.constant 0 : index
      %c0_9 = arith.constant 0 : index
      %11 = vector.load %arg2[%c0_8, %c0_9] : memref<16x128xbf16, #tpu.memory_space<vmem>>, vector<16x128xbf16>
      %c0_10 = arith.constant 0 : index
      %c0_11 = arith.constant 0 : index
      %12 = vector.load %arg3[%c0_10, %c0_11] : memref<128x128xbf16, #tpu.memory_space<vmem>>, vector<128x128xbf16>
      %cst_12 = arith.constant dense<0.000000e+00> : vector<16x128xf32>
      %13 = tpu.matmul %11, %12, %cst_12 {dimension_numbers = #tpu.dot_dimension_numbers<[1], [0], [0], [1], [0, 0, 1, 1], [], []>} : vector<16x128xbf16>, vector<128x128xbf16>, vector<16x128xf32> -> vector<16x128xf32>
      %c0_13 = arith.constant 0 : index
      %c0_14 = arith.constant 0 : index
      %14 = vector.load %arg4[%c0_13, %c0_14] : memref<1x128xf32, #tpu.memory_space<vmem>>, vector<1x128xf32>
      %15 = vector.broadcast %14 : vector<1x128xf32> to vector<16x128xf32>
      %16 = arith.addf %13, %15 : vector<16x128xf32>
      %17 = arith.mulf %16, %16 : vector<16x128xf32>
      %18 = arith.mulf %16, %17 : vector<16x128xf32>
      %cst_15 = arith.constant 4.471500e-02 : f32
      %19 = vector.broadcast %cst_15 : f32 to vector<16x128xf32>
      %20 = arith.mulf %19, %18 : vector<16x128xf32>
      %21 = arith.addf %16, %20 : vector<16x128xf32>
      %cst_16 = arith.constant 0.797884583 : f32
      %22 = vector.broadcast %cst_16 : f32 to vector<16x128xf32>
      %23 = arith.mulf %22, %21 : vector<16x128xf32>
      %24 = math.tanh %23 : vector<16x128xf32>
      %cst_17 = arith.constant 1.000000e+00 : f32
      %25 = vector.broadcast %cst_17 : f32 to vector<16x128xf32>
      %26 = arith.addf %25, %24 : vector<16x128xf32>
      %cst_18 = arith.constant 5.000000e-01 : f32
      %27 = vector.broadcast %cst_18 : f32 to vector<16x128xf32>
      %28 = arith.mulf %27, %26 : vector<16x128xf32>
      %29 = arith.mulf %16, %28 : vector<16x128xf32>
      %30 = arith.truncf %29 : vector<16x128xf32> to vector<16x128xbf16>
      %c0_19 = arith.constant 0 : index
      %c0_20 = arith.constant 0 : index
      %31 = vector.load %arg8[%c0_19, %c0_20] : memref<16x128xbf16, #tpu.memory_space<vmem>>, vector<16x128xbf16>
      tpu.vector_store %arg8[%c0_19, %c0_20], %30 {strides = array<i32>} : memref<16x128xbf16, #tpu.memory_space<vmem>>, vector<16x128xbf16>,
    } else {
    }
    %c0 = arith.constant 0 : index
    %c0_1 = arith.constant 0 : index
    %3 = vector.load %arg8[%c0, %c0_1] : memref<16x128xbf16, #tpu.memory_space<vmem>>, vector<16x128xbf16>
    %c0_2 = arith.constant 0 : index
    %c0_3 = arith.constant 0 : index
    %4 = vector.load %arg5[%c0_2, %c0_3] : memref<128x128xbf16, #tpu.memory_space<vmem>>, vector<128x128xbf16>
    %cst = arith.constant dense<0.000000e+00> : vector<16x128xf32>
    %5 = tpu.matmul %3, %4, %cst {dimension_numbers = #tpu.dot_dimension_numbers<[1], [0], [0], [1], [0, 0, 1, 1], [], []>} : vector<16x128xbf16>, vector<128x128xbf16>, vector<16x128xf32> -> vector<16x128xf32>
    %c0_4 = arith.constant 0 : index
    %c0_5 = arith.constant 0 : index
    %6 = vector.load %arg6[%c0_4, %c0_5] : memref<1x128xf32, #tpu.memory_space<vmem>>, vector<1x128xf32>
    %7 = vector.broadcast %6 : vector<1x128xf32> to vector<16x128xf32>
    %8 = arith.addf %5, %7 : vector<16x128xf32>
    %9 = arith.truncf %8 : vector<16x128xf32> to vector<16x128xbf16>
    %c0_6 = arith.constant 0 : index
    %c0_7 = arith.constant 0 : index
    %10 = vector.load %arg7[%c0_6, %c0_7] : memref<16x128xbf16, #tpu.memory_space<vmem>>, vector<16x128xbf16>
    tpu.vector_store %arg7[%c0_6, %c0_7], %9 {strides = array<i32>} : memref<16x128xbf16, #tpu.memory_space<vmem>>, vector<16x128xbf16>,
    return
  }
  func.func @transform_0(%arg0: i32, %arg1: i32) -> (i32, i32) {
    %c0_i32 = arith.constant 0 : i32
    %c0_i32_0 = arith.constant 0 : i32
    return %arg0, %c0_i32 : i32, i32
  }
  func.func @transform_1(%arg0: i32, %arg1: i32) -> (i32, i32) {
    %c0_i32 = arith.constant 0 : i32
    %c0_i32_0 = arith.constant 0 : i32
    %c0_i32_1 = arith.constant 0 : i32
    return %c0_i32, %c0_i32_0 : i32, i32
  }
  func.func @transform_2(%arg0: i32, %arg1: i32) -> (i32, i32) {
    %c0_i32 = arith.constant 0 : i32
    %c0_i32_0 = arith.constant 0 : i32
    %c0_i32_1 = arith.constant 0 : i32
    return %c0_i32, %c0_i32_0 : i32, i32
  }
  func.func @transform_3(%arg0: i32, %arg1: i32) -> (i32, i32) {
    %c0_i32 = arith.constant 0 : i32
    %c0_i32_0 = arith.constant 0 : i32
    return %c0_i32, %arg1 : i32, i32
  }
  func.func @transform_4(%arg0: i32, %arg1: i32) -> (i32, i32) {
    %c0_i32 = arith.constant 0 : i32
    %c0_i32_0 = arith.constant 0 : i32
    return %c0_i32, %arg1 : i32, i32
  }
  func.func @transform_5(%arg0: i32, %arg1: i32) -> (i32, i32) {
    %c0_i32 = arith.constant 0 : i32
    return %arg0, %arg1 : i32, i32
  }
}

module attributes {stable_mosaic.version = 11 : i64} {
  func.func @_masked_mlp_kernel(%arg0: i32, %arg1: i32, %arg2: memref<16x128xbf16, #tpu.memory_space<vmem>>, %arg3: memref<128x128xbf16, #tpu.memory_space<vmem>>, %arg4: memref<1x128xf32, #tpu.memory_space<vmem>>, %arg5: memref<128x128xbf16, #tpu.memory_space<vmem>>, %arg6: memref<1x128xf32, #tpu.memory_space<vmem>>, %arg7: memref<16x128xbf16, #tpu.memory_space<vmem>>, %arg8: memref<16x128xbf16, #tpu.memory_space<vmem>>) attributes {dimension_semantics = [#tpu.dimension_semantics<parallel>, #tpu.dimension_semantics<arbitrary>], iteration_bounds = array<i64: 1, 1>, scalar_prefetch = 0 : i64, scratch_operands = 1 : i64, tpu.core_type = #tpu.core_type<tc>, window_params = [{transform_indices = @transform_0, window_bounds = array<i64: 16, 128>}, {pipeline_mode = #tpu.pipeline_mode<synchronous>, transform_indices = @transform_1, window_bounds = array<i64: 128, 128>}, {pipeline_mode = #tpu.pipeline_mode<synchronous>, transform_indices = @transform_2, window_bounds = array<i64: 1, 128>}, {transform_indices = @transform_3, window_bounds = array<i64: 128, 128>}, {transform_indices = @transform_4, window_bounds = array<i64: 1, 128>}, {transform_indices = @transform_5, window_bounds = array<i64: 16, 128>}]} {
    %c0_i32 = arith.constant 0 : i32
    %0 = arith.cmpi eq, %arg1, %c0_i32 : i32
    %1 = arith.extui %0 : i1 to i32
    %c0_i32_0 = arith.constant 0 : i32
    %2 = arith.cmpi ne, %1, %c0_i32_0 : i32
    scf.if %2 {
      %c0_8 = arith.constant 0 : index
      %c0_9 = arith.constant 0 : index
      %11 = vector.load %arg2[%c0_8, %c0_9] : memref<16x128xbf16, #tpu.memory_space<vmem>>, vector<16x128xbf16>
      %c0_10 = arith.constant 0 : index
      %c0_11 = arith.constant 0 : index
      %12 = vector.load %arg3[%c0_10, %c0_11] : memref<128x128xbf16, #tpu.memory_space<vmem>>, vector<128x128xbf16>
      %cst_12 = arith.constant dense<0.000000e+00> : vector<16x128xf32>
      %13 = tpu.matmul %11, %12, %cst_12 {dimension_numbers = #tpu.dot_dimension_numbers<[1], [0], [0], [1], [0, 0, 1, 1], [], []>} : vector<16x128xbf16>, vector<128x128xbf16>, vector<16x128xf32> -> vector<16x128xf32>
      %c0_13 = arith.constant 0 : index
      %c0_14 = arith.constant 0 : index
      %14 = vector.load %arg4[%c0_13, %c0_14] : memref<1x128xf32, #tpu.memory_space<vmem>>, vector<1x128xf32>
      %15 = vector.broadcast %14 : vector<1x128xf32> to vector<16x128xf32>
      %16 = arith.addf %13, %15 : vector<16x128xf32>
      %17 = arith.mulf %16, %16 : vector<16x128xf32>
      %18 = arith.mulf %16, %17 : vector<16x128xf32>
      %cst_15 = arith.constant 4.471500e-02 : f32
      %19 = vector.broadcast %cst_15 : f32 to vector<16x128xf32>
      %20 = arith.mulf %19, %18 : vector<16x128xf32>
      %21 = arith.addf %16, %20 : vector<16x128xf32>
      %cst_16 = arith.constant 0.797884583 : f32
      %22 = vector.broadcast %cst_16 : f32 to vector<16x128xf32>
      %23 = arith.mulf %22, %21 : vector<16x128xf32>
      %24 = math.tanh %23 : vector<16x128xf32>
      %cst_17 = arith.constant 1.000000e+00 : f32
      %25 = vector.broadcast %cst_17 : f32 to vector<16x128xf32>
      %26 = arith.addf %25, %24 : vector<16x128xf32>
      %cst_18 = arith.constant 5.000000e-01 : f32
      %27 = vector.broadcast %cst_18 : f32 to vector<16x128xf32>
      %28 = arith.mulf %27, %26 : vector<16x128xf32>
      %29 = arith.mulf %16, %28 : vector<16x128xf32>
      %30 = arith.truncf %29 : vector<16x128xf32> to vector<16x128xbf16>
      %c0_19 = arith.constant 0 : index
      %c0_20 = arith.constant 0 : index
      %31 = vector.load %arg8[%c0_19, %c0_20] : memref<16x128xbf16, #tpu.memory_space<vmem>>, vector<16x128xbf16>
      tpu.vector_store %arg8[%c0_19, %c0_20], %30 {strides = array<i32>} : memref<16x128xbf16, #tpu.memory_space<vmem>>, vector<16x128xbf16>,
    } else {
    }
    %c0 = arith.constant 0 : index
    %c0_1 = arith.constant 0 : index
    %3 = vector.load %arg8[%c0, %c0_1] : memref<16x128xbf16, #tpu.memory_space<vmem>>, vector<16x128xbf16>
    %c0_2 = arith.constant 0 : index
    %c0_3 = arith.constant 0 : index
    %4 = vector.load %arg5[%c0_2, %c0_3] : memref<128x128xbf16, #tpu.memory_space<vmem>>, vector<128x128xbf16>
    %cst = arith.constant dense<0.000000e+00> : vector<16x128xf32>
    %5 = tpu.matmul %3, %4, %cst {dimension_numbers = #tpu.dot_dimension_numbers<[1], [0], [0], [1], [0, 0, 1, 1], [], []>} : vector<16x128xbf16>, vector<128x128xbf16>, vector<16x128xf32> -> vector<16x128xf32>
    %c0_4 = arith.constant 0 : index
    %c0_5 = arith.constant 0 : index
    %6 = vector.load %arg6[%c0_4, %c0_5] : memref<1x128xf32, #tpu.memory_space<vmem>>, vector<1x128xf32>
    %7 = vector.broadcast %6 : vector<1x128xf32> to vector<16x128xf32>
    %8 = arith.addf %5, %7 : vector<16x128xf32>
    %9 = arith.truncf %8 : vector<16x128xf32> to vector<16x128xbf16>
    %c0_6 = arith.constant 0 : index
    %c0_7 = arith.constant 0 : index
    %10 = vector.load %arg7[%c0_6, %c0_7] : memref<16x128xbf16, #tpu.memory_space<vmem>>, vector<16x128xbf16>
    tpu.vector_store %arg7[%c0_6, %c0_7], %9 {strides = array<i32>} : memref<16x128xbf16, #tpu.memory_space<vmem>>, vector<16x128xbf16>,
    return
  }
  func.func @transform_0(%arg0: i32, %arg1: i32) -> (i32, i32) {
    %c0_i32 = arith.constant 0 : i32
    %c0_i32_0 = arith.constant 0 : i32
    return %arg0, %c0_i32 : i32, i32
  }
  func.func @transform_1(%arg0: i32, %arg1: i32) -> (i32, i32) {
    %c0_i32 = arith.constant 0 : i32
    %c0_i32_0 = arith.constant 0 : i32
    %c0_i32_1 = arith.constant 0 : i32
    return %c0_i32, %c0_i32_0 : i32, i32
  }
  func.func @transform_2(%arg0: i32, %arg1: i32) -> (i32, i32) {
    %c0_i32 = arith.constant 0 : i32
    %c0_i32_0 = arith.constant 0 : i32
    %c0_i32_1 = arith.constant 0 : i32
    return %c0_i32, %c0_i32_0 : i32, i32
  }
  func.func @transform_3(%arg0: i32, %arg1: i32) -> (i32, i32) {
    %c0_i32 = arith.constant 0 : i32
    %c0_i32_0 = arith.constant 0 : i32
    return %c0_i32, %arg1 : i32, i32
  }
  func.func @transform_4(%arg0: i32, %arg1: i32) -> (i32, i32) {
    %c0_i32 = arith.constant 0 : i32
    %c0_i32_0 = arith.constant 0 : i32
    return %c0_i32, %arg1 : i32, i32
  }
  func.func @transform_5(%arg0: i32, %arg1: i32) -> (i32, i32) {
    %c0_i32 = arith.constant 0 : i32
    return %arg0, %arg1 : i32, i32
  }
}

</mosaic_0001>

<llo_original>
// kernel: tpu_custom_call.1
$region0: #{tpu_custom_call.1}
  #allocation0 [shape = 'u32[]', space=smem, size = 0x4, offset = 0x4, fixed_abs, tag = 'smem constant byte address 0x4 - core index']
  #allocation1 [shape = 'u32[72,128]{1,0:T(1,128)}', space=vmem, size = 0x9000, scoped, tag = 'internal scratch']
  #allocation2 [shape = 'bf16[16,128]{1,0:T(8,128)(2,1)}', space=vmem, size = 0x1000, scoped, tag = 'scratch operand']
  %s0 = inlined_call_operand.hbm [shape: bf16[16,128], index: 0, kind: input, shape index: {}]
  %s1 = inlined_call_operand.hbm [shape: bf16[128,128], index: 1, kind: input, shape index: {}]
  %s2 = inlined_call_operand.vmem [shape: f32[1,128], index: 2, kind: input, shape index: {}]
  %s3 = inlined_call_operand.hbm [shape: bf16[128,128], index: 3, kind: input, shape index: {}]
  %s4 = inlined_call_operand.vmem [shape: f32[1,128], index: 4, kind: input, shape index: {}]
  %s5 = inlined_call_operand.hbm [shape: bf16[16,128], index: 5, kind: output, shape index: {}]
  %s6 = sld [smem:[#allocation0]]
  $region46: #{tpu_custom_call.1} parent=0
    _
  %s8 = ssub.s32 1, %s6
  %s9 = scalar_select 0, %s8, %s6
  $region1: #{tpu_custom_call.1} parent=0
    #allocation3 [shape = 'u8[4096]{0}', space=vmem, size = 0x1000, scoped, tag = 'input window, operand 0, single buffered']
    #allocation4 [shape = 's32[1]{0}', space=sflag, size = 0x4, scoped, tag = 'scoped memory for tpu_custom_call.1']
    #allocation5 [shape = 's32[1]{0}', space=sflag, size = 0x4, scoped, tag = 'scoped memory for tpu_custom_call.1']
    #allocation6 [shape = 'u8[32768]{0}', space=vmem, size = 0x8000, scoped, tag = 'input window, operand 1, single buffered']
    #allocation7 [shape = 's32[1]{0}', space=sflag, size = 0x4, scoped, tag = 'scoped memory for tpu_custom_call.1']
    #allocation8 [shape = 'u8[32768]{0}', space=vmem, size = 0x8000, scoped, tag = 'input window, operand 3, single buffered']
    #allocation9 [shape = 'u8[4096]{0}', space=vmem, size = 0x1000, scoped, tag = 'output window, operand 0, single buffered']
    %10 = vsyncpa [#allocation4], 0
    %11 = vsyncpa [#allocation7], 0
    %12 = vsyncpa [#allocation5], 0
    // Predicated region
    $region2: #{tpu_custom_call.1} parent=1 // pred_check
      _
    $region3: #{tpu_custom_call.1} parent=1 // pred_check_branch
      %14 = sbr.rel (0) target = $region5
    $region4: #{tpu_custom_call.1} parent=1 // pred_region
      %16 = vsyncadd [#allocation4], 0
      %s17 = sshll.u32 %s0, 4
      %s18 = int_to_ptr.hbm [resolvable:$true] %s17
      %s19 = sshll.u32 [#allocation3], 4
      %s20 = int_to_ptr.vmem [resolvable:$true] %s19
      %25 = dma.hbm_to_vmem [thread:$0]  %s18, 128, %s20, [#allocation4], 64, 64, 4
    $region5: #{tpu_custom_call.1} parent=1 // pred_fallthru
      _
    // Predicated region
    $region6: #{tpu_custom_call.1} parent=1 // pred_check
      _
    $region7: #{tpu_custom_call.1} parent=1 // pred_check_branch
      %27 = sbr.rel (0) target = $region9
    $region8: #{tpu_custom_call.1} parent=1 // pred_region
      %29 = vsyncadd [#allocation7], 0
      %s30 = sshll.u32 %s1, 4
      %s31 = int_to_ptr.hbm [resolvable:$true] %s30
      %s32 = sshll.u32 [#allocation6], 4
      %s33 = int_to_ptr.vmem [resolvable:$true] %s32
      %38 = dma.hbm_to_vmem [thread:$0]  %s31, 1024, %s33, [#allocation7], 64, 64, 4
    $region9: #{tpu_custom_call.1} parent=1 // pred_fallthru
      _
    // Predicated region
    $region10: #{tpu_custom_call.1} parent=1 // pred_check
      _
    $region11: #{tpu_custom_call.1} parent=1 // pred_check_branch
      %40 = sbr.rel (0) target = $region13
    $region12: #{tpu_custom_call.1} parent=1 // pred_region
      _
    $region13: #{tpu_custom_call.1} parent=1 // pred_fallthru
      _
    // Predicated region
    $region14: #{tpu_custom_call.1} parent=1 // pred_check
      _
    $region15: #{tpu_custom_call.1} parent=1 // pred_check_branch
      %42 = sbr.rel (0) target = $region17
    $region16: #{tpu_custom_call.1} parent=1 // pred_region
      %44 = vsyncadd [#allocation7], 0
      %s45 = sshll.u32 %s3, 4
      %s46 = int_to_ptr.hbm [resolvable:$true] %s45
      %s47 = sshll.u32 [#allocation8], 4
      %s48 = int_to_ptr.vmem [resolvable:$true] %s47
      %53 = dma.hbm_to_vmem [thread:$0]  %s46, 1024, %s48, [#allocation7], 64, 64, 4
    $region17: #{tpu_custom_call.1} parent=1 // pred_fallthru
      _
    // Predicated region
    $region18: #{tpu_custom_call.1} parent=1 // pred_check
      _
    $region19: #{tpu_custom_call.1} parent=1 // pred_check_branch
      %55 = sbr.rel (0) target = $region21
    $region20: #{tpu_custom_call.1} parent=1 // pred_region
      _
    $region21: #{tpu_custom_call.1} parent=1 // pred_fallthru
      _
    // Predicated region
    $region22: #{tpu_custom_call.1} parent=1 // pred_check
      _
    $region23: #{tpu_custom_call.1} parent=1 // pred_check_branch
      %57 = sbr.rel (0) target = $region25
    $region24: #{tpu_custom_call.1} parent=1 // pred_region
      %59 = dma.done [#allocation4], 128
    $region25: #{tpu_custom_call.1} parent=1 // pred_fallthru
      _
    // Predicated region
    $region26: #{tpu_custom_call.1} parent=1 // pred_check
      _
    $region27: #{tpu_custom_call.1} parent=1 // pred_check_branch
      %61 = sbr.rel (0) target = $region29
    $region28: #{tpu_custom_call.1} parent=1 // pred_region
      %63 = dma.done [#allocation7], 1024
    $region29: #{tpu_custom_call.1} parent=1 // pred_fallthru
      _
    // Predicated region
    $region30: #{tpu_custom_call.1} parent=1 // pred_check
      _
    $region31: #{tpu_custom_call.1} parent=1 // pred_check_branch
      %65 = sbr.rel (0) target = $region33
    $region32: #{tpu_custom_call.1} parent=1 // pred_region
      %67 = dma.done [#allocation7], 1024
    $region33: #{tpu_custom_call.1} parent=1 // pred_fallthru
      _
    %p68 = scmp.eq.s32.totalorder 0, 0
    // Predicated region
    $region34: #{tpu_custom_call.1} parent=1 // pred_check
      %p69 = pneg %p68
    $region35: #{tpu_custom_call.1} parent=1 // pred_check_branch
      %71 = sbr.rel (%p69) target = $region37
    $region36: #{tpu_custom_call.1} parent=1 // pred_region
      %v72 = vld [vmem:[#allocation3] sm:$0xf]
      %v73 = vld [vmem:[#allocation3 + $0x4] sm:$0xf]
      %v74 = vld [vmem:[#allocation6] sm:$0xf]
      %v75 = vld [vmem:[#allocation6 + $0x4] sm:$0xf]
      %v76 = vld [vmem:[#allocation6 + $0x8] sm:$0xf]
      %v77 = vld [vmem:[#allocation6 + $0xc] sm:$0xf]
      %v78 = vld [vmem:[#allocation6 + $0x10] sm:$0xf]
      %v79 = vld [vmem:[#allocation6 + $0x14] sm:$0xf]
      %v80 = vld [vmem:[#allocation6 + $0x18] sm:$0xf]
      %v81 = vld [vmem:[#allocation6 + $0x1c] sm:$0xf]
      %v82 = vld [vmem:[#allocation6 + $0x20] sm:$0xf]
      %v83 = vld [vmem:[#allocation6 + $0x24] sm:$0xf]
      %v84 = vld [vmem:[#allocation6 + $0x28] sm:$0xf]
      %v85 = vld [vmem:[#allocation6 + $0x2c] sm:$0xf]
      %v86 = vld [vmem:[#allocation6 + $0x30] sm:$0xf]
      %v87 = vld [vmem:[#allocation6 + $0x34] sm:$0xf]
      %v88 = vld [vmem:[#allocation6 + $0x38] sm:$0xf]
      %v89 = vld [vmem:[#allocation6 + $0x3c] sm:$0xf]
      %v90 = vld [vmem:[%s2] sm:$0x1]
      %v92 = vperm.slane %v90, 0
      %v96 = vunpack.c.l.b16 %v72
      %v97 = vunpack.c.l.b16 %v73
      %v98 = vpack.c.b16 %v97, %v96
      %v116 = vunpack.c.l.b16 %v74
      %v117 = vunpack.c.l.b16 %v75
      %v118 = vunpack.c.l.b16 %v76
      %v119 = vunpack.c.l.b16 %v77
      %v120 = vunpack.c.l.b16 %v78
      %v121 = vunpack.c.l.b16 %v79
      %v122 = vunpack.c.l.b16 %v80
      %v123 = vunpack.c.l.b16 %v81
      %v124 = vunpack.c.l.b16 %v82
      %v125 = vunpack.c.l.b16 %v83
      %v126 = vunpack.c.l.b16 %v84
      %v127 = vunpack.c.l.b16 %v85
      %v128 = vunpack.c.l.b16 %v86
      %v129 = vunpack.c.l.b16 %v87
      %v130 = vunpack.c.l.b16 %v88
      %v131 = vunpack.c.l.b16 %v89
      %v132 = vpack.c.b16 %v117, %v116
      %v133 = vpack.c.b16 %v119, %v118
      %v134 = vpack.c.b16 %v121, %v120
      %v135 = vpack.c.b16 %v123, %v122
      %v136 = vpack.c.b16 %v125, %v124
      %v137 = vpack.c.b16 %v127, %v126
      %v138 = vpack.c.b16 %v129, %v128
      %v139 = vpack.c.b16 %v131, %v130
      %148 = vmatpush.bf16.msra.mxu0 %v139
      %149 = vmatpush.bf16.msra.mxu0 %v138
      %150 = vmatpush.bf16.msra.mxu0 %v137
      %151 = vmatpush.bf16.msra.mxu0 %v136
      %152 = vmatpush.bf16.msra.mxu0 %v135
      %153 = vmatpush.bf16.msra.mxu0 %v134
      %154 = vmatpush.bf16.msra.mxu0 %v133
      %155 = vmatpush.bf16.msra.mxu0 %v132
      %156 = vmatmul.bf16.gmra.mxu0 %v98
      %v157 = vpop.f32.mrf.mxu0
      %v158 = vadd.f32 %v92, %v157
      %v159 = vpop.f32.mrf.mxu0
      %v160 = vadd.f32 %v92, %v159
      %161 = vdwg.mxu0
      %v162 = vmul.f32 %v158, %v158
      %v163 = vmul.f32 %v160, %v160
      %v164 = vmul.f32 %v158, %v162
      %v165 = vmul.f32 %v160, %v163
      %v166 = vmul.f32 %v164, 0.044715
      %v167 = vmul.f32 %v165, 0.044715
      %v168 = vadd.f32 %v158, %v166
      %v169 = vadd.f32 %v160, %v167
      %v170 = vmul.f32 %v168, 0.7978846
      %v171 = vmul.f32 %v169, 0.7978846
      %v172 = vtanh.pop %v170
      %v173 = vtanh.pop %v171
      %v174 = vadd.f32 %v172, 1.0
      %v175 = vadd.f32 %v173, 1.0
      %v176 = vmul.f32 %v174, 0.5
      %v177 = vmul.f32 %v175, 0.5
      %v178 = vmul.f32 %v158, %v176
      %v179 = vmul.f32 %v160, %v177
      %v180 = vpack.c.bf16 %v178, %v178
      %v181 = vpack.c.bf16 %v179, %v179
      %182 = vst [vmem:[#allocation2] sm:$0xf] %v180
      %183 = vst [vmem:[#allocation2 + $0x4] sm:$0xf] %v181
    $region37: #{tpu_custom_call.1} parent=1 // pred_fallthru
      _
    %v184 = vld [vmem:[#allocation2] sm:$0xf]
    %v185 = vld [vmem:[#allocation2 + $0x4] sm:$0xf]
    %v186 = vld [vmem:[#allocation8] sm:$0xf]
    %v187 = vld [vmem:[#allocation8 + $0x4] sm:$0xf]
    %v188 = vld [vmem:[#allocation8 + $0x8] sm:$0xf]
    %v189 = vld [vmem:[#allocation8 + $0xc] sm:$0xf]
    %v190 = vld [vmem:[#allocation8 + $0x10] sm:$0xf]
    %v191 = vld [vmem:[#allocation8 + $0x14] sm:$0xf]
    %v192 = vld [vmem:[#allocation8 + $0x18] sm:$0xf]
    %v193 = vld [vmem:[#allocation8 + $0x1c] sm:$0xf]
    %v194 = vld [vmem:[#allocation8 + $0x20] sm:$0xf]
    %v195 = vld [vmem:[#allocation8 + $0x24] sm:$0xf]
    %v196 = vld [vmem:[#allocation8 + $0x28] sm:$0xf]
    %v197 = vld [vmem:[#allocation8 + $0x2c] sm:$0xf]
    %v198 = vld [vmem:[#allocation8 + $0x30] sm:$0xf]
    %v199 = vld [vmem:[#allocation8 + $0x34] sm:$0xf]
    %v200 = vld [vmem:[#allocation8 + $0x38] sm:$0xf]
    %v201 = vld [vmem:[#allocation8 + $0x3c] sm:$0xf]
    %v202 = vld [vmem:[%s4] sm:$0x1]
    %v204 = vperm.slane %v202, 0
    %v208 = vunpack.c.l.b16 %v184
    %v209 = vunpack.c.l.b16 %v185
    %v210 = vpack.c.b16 %v209, %v208
    %v228 = vunpack.c.l.b16 %v186
    %v229 = vunpack.c.l.b16 %v187
    %v230 = vunpack.c.l.b16 %v188
    %v231 = vunpack.c.l.b16 %v189
    %v232 = vunpack.c.l.b16 %v190
    %v233 = vunpack.c.l.b16 %v191
    %v234 = vunpack.c.l.b16 %v192
    %v235 = vunpack.c.l.b16 %v193
    %v236 = vunpack.c.l.b16 %v194
    %v237 = vunpack.c.l.b16 %v195
    %v238 = vunpack.c.l.b16 %v196
    %v239 = vunpack.c.l.b16 %v197
    %v240 = vunpack.c.l.b16 %v198
    %v241 = vunpack.c.l.b16 %v199
    %v242 = vunpack.c.l.b16 %v200
    %v243 = vunpack.c.l.b16 %v201
    %v244 = vpack.c.b16 %v229, %v228
    %v245 = vpack.c.b16 %v231, %v230
    %v246 = vpack.c.b16 %v233, %v232
    %v247 = vpack.c.b16 %v235, %v234
    %v248 = vpack.c.b16 %v237, %v236
    %v249 = vpack.c.b16 %v239, %v238
    %v250 = vpack.c.b16 %v241, %v240
    %v251 = vpack.c.b16 %v243, %v242
    %260 = vmatpush.bf16.msra.mxu0 %v251
    %261 = vmatpush.bf16.msra.mxu0 %v250
    %262 = vmatpush.bf16.msra.mxu0 %v249
    %263 = vmatpush.bf16.msra.mxu0 %v248
    %264 = vmatpush.bf16.msra.mxu0 %v247
    %265 = vmatpush.bf16.msra.mxu0 %v246
    %266 = vmatpush.bf16.msra.mxu0 %v245
    %267 = vmatpush.bf16.msra.mxu0 %v244
    %268 = vmatmul.bf16.gmra.mxu0 %v210
    %v269 = vpop.f32.mrf.mxu0
    %v270 = vadd.f32 %v204, %v269
    %v271 = vpop.f32.mrf.mxu0
    %v272 = vadd.f32 %v204, %v271
    %273 = vdwg.mxu0
    %v274 = vpack.c.bf16 %v270, %v270
    %v275 = vpack.c.bf16 %v272, %v272
    %276 = vst [vmem:[#allocation9] sm:$0xf] %v274
    %277 = vst [vmem:[#allocation9 + $0x4] sm:$0xf] %v275
    // Predicated region
    $region38: #{tpu_custom_call.1} parent=1 // pred_check
      _
    $region39: #{tpu_custom_call.1} parent=1 // pred_check_branch
      %279 = sbr.rel (0) target = $region41
    $region40: #{tpu_custom_call.1} parent=1 // pred_region
      %281 = vsyncadd [#allocation5], 0
      %s282 = sshll.u32 [#allocation9], 4
      %s283 = int_to_ptr.vmem [resolvable:$true] %s282
      %s284 = sshll.u32 %s5, 4
      %s285 = int_to_ptr.hbm [resolvable:$true] %s284
      %290 = dma.vmem_to_hbm [thread:$0]  %s283, 128, %s285, [#allocation5], 64, 64, 4
    $region41: #{tpu_custom_call.1} parent=1 // pred_fallthru
      _
    // Predicated region
    $region42: #{tpu_custom_call.1} parent=1 // pred_check
      _
    $region43: #{tpu_custom_call.1} parent=1 // pred_check_branch
      %292 = sbr.rel (0) target = $region45
    $region44: #{tpu_custom_call.1} parent=1 // pred_region
      %294 = dma.done [#allocation5], 128
    $region45: #{tpu_custom_call.1} parent=1 // pred_fallthru
      _
    %295 = vsyncpa [#allocation4], 1
    %296 = vsyncpa [#allocation7], 1
    %297 = vsyncpa [#allocation5], 1

// kernel: tpu_custom_call.1
$region0: #{tpu_custom_call.1}
  #allocation0 [shape = 'u32[]', space=smem, size = 0x4, offset = 0x4, fixed_abs, tag = 'smem constant byte address 0x4 - core index']
  #allocation1 [shape = 'u32[72,128]{1,0:T(1,128)}', space=vmem, size = 0x9000, scoped, tag = 'internal scratch']
  #allocation2 [shape = 'bf16[16,128]{1,0:T(8,128)(2,1)}', space=vmem, size = 0x1000, scoped, tag = 'scratch operand']
  %s0 = inlined_call_operand.hbm [shape: bf16[16,128], index: 0, kind: input, shape index: {}]
  %s1 = inlined_call_operand.hbm [shape: bf16[128,128], index: 1, kind: input, shape index: {}]
  %s2 = inlined_call_operand.vmem [shape: f32[1,128], index: 2, kind: input, shape index: {}]
  %s3 = inlined_call_operand.hbm [shape: bf16[128,128], index: 3, kind: input, shape index: {}]
  %s4 = inlined_call_operand.vmem [shape: f32[1,128], index: 4, kind: input, shape index: {}]
  %s5 = inlined_call_operand.hbm [shape: bf16[16,128], index: 5, kind: output, shape index: {}]
  %s6 = sld [smem:[#allocation0]]
  $region46: #{tpu_custom_call.1} parent=0
    _
  %s8 = ssub.s32 1, %s6
  %s9 = scalar_select 0, %s8, %s6
  $region1: #{tpu_custom_call.1} parent=0
    #allocation3 [shape = 'u8[4096]{0}', space=vmem, size = 0x1000, scoped, tag = 'input window, operand 0, single buffered']
    #allocation4 [shape = 's32[1]{0}', space=sflag, size = 0x4, scoped, tag = 'scoped memory for tpu_custom_call.1']
    #allocation5 [shape = 's32[1]{0}', space=sflag, size = 0x4, scoped, tag = 'scoped memory for tpu_custom_call.1']
    #allocation6 [shape = 'u8[32768]{0}', space=vmem, size = 0x8000, scoped, tag = 'input window, operand 1, single buffered']
    #allocation7 [shape = 's32[1]{0}', space=sflag, size = 0x4, scoped, tag = 'scoped memory for tpu_custom_call.1']
    #allocation8 [shape = 'u8[32768]{0}', space=vmem, size = 0x8000, scoped, tag = 'input window, operand 3, single buffered']
    #allocation9 [shape = 'u8[4096]{0}', space=vmem, size = 0x1000, scoped, tag = 'output window, operand 0, single buffered']
    %10 = vsyncpa [#allocation4], 0
    %11 = vsyncpa [#allocation7], 0
    %12 = vsyncpa [#allocation5], 0
    // Predicated region
    $region2: #{tpu_custom_call.1} parent=1 // pred_check
      _
    $region3: #{tpu_custom_call.1} parent=1 // pred_check_branch
      %14 = sbr.rel (0) target = $region5
    $region4: #{tpu_custom_call.1} parent=1 // pred_region
      %16 = vsyncadd [#allocation4], 0
      %s17 = sshll.u32 %s0, 4
      %s18 = int_to_ptr.hbm [resolvable:$true] %s17
      %s19 = sshll.u32 [#allocation3], 4
      %s20 = int_to_ptr.vmem [resolvable:$true] %s19
      %25 = dma.hbm_to_vmem [thread:$0]  %s18, 128, %s20, [#allocation4], 64, 64, 4
    $region5: #{tpu_custom_call.1} parent=1 // pred_fallthru
      _
    // Predicated region
    $region6: #{tpu_custom_call.1} parent=1 // pred_check
      _
    $region7: #{tpu_custom_call.1} parent=1 // pred_check_branch
      %27 = sbr.rel (0) target = $region9
    $region8: #{tpu_custom_call.1} parent=1 // pred_region
      %29 = vsyncadd [#allocation7], 0
      %s30 = sshll.u32 %s1, 4
      %s31 = int_to_ptr.hbm [resolvable:$true] %s30
      %s32 = sshll.u32 [#allocation6], 4
      %s33 = int_to_ptr.vmem [resolvable:$true] %s32
      %38 = dma.hbm_to_vmem [thread:$0]  %s31, 1024, %s33, [#allocation7], 64, 64, 4
    $region9: #{tpu_custom_call.1} parent=1 // pred_fallthru
      _
    // Predicated region
    $region10: #{tpu_custom_call.1} parent=1 // pred_check
      _
    $region11: #{tpu_custom_call.1} parent=1 // pred_check_branch
      %40 = sbr.rel (0) target = $region13
    $region12: #{tpu_custom_call.1} parent=1 // pred_region
      _
    $region13: #{tpu_custom_call.1} parent=1 // pred_fallthru
      _
    // Predicated region
    $region14: #{tpu_custom_call.1} parent=1 // pred_check
      _
    $region15: #{tpu_custom_call.1} parent=1 // pred_check_branch
      %42 = sbr.rel (0) target = $region17
    $region16: #{tpu_custom_call.1} parent=1 // pred_region
      %44 = vsyncadd [#allocation7], 0
      %s45 = sshll.u32 %s3, 4
      %s46 = int_to_ptr.hbm [resolvable:$true] %s45
      %s47 = sshll.u32 [#allocation8], 4
      %s48 = int_to_ptr.vmem [resolvable:$true] %s47
      %53 = dma.hbm_to_vmem [thread:$0]  %s46, 1024, %s48, [#allocation7], 64, 64, 4
    $region17: #{tpu_custom_call.1} parent=1 // pred_fallthru
      _
    // Predicated region
    $region18: #{tpu_custom_call.1} parent=1 // pred_check
      _
    $region19: #{tpu_custom_call.1} parent=1 // pred_check_branch
      %55 = sbr.rel (0) target = $region21
    $region20: #{tpu_custom_call.1} parent=1 // pred_region
      _
    $region21: #{tpu_custom_call.1} parent=1 // pred_fallthru
      _
    // Predicated region
    $region22: #{tpu_custom_call.1} parent=1 // pred_check
      _
    $region23: #{tpu_custom_call.1} parent=1 // pred_check_branch
      %57 = sbr.rel (0) target = $region25
    $region24: #{tpu_custom_call.1} parent=1 // pred_region
      %59 = dma.done [#allocation4], 128
    $region25: #{tpu_custom_call.1} parent=1 // pred_fallthru
      _
    // Predicated region
    $region26: #{tpu_custom_call.1} parent=1 // pred_check
      _
    $region27: #{tpu_custom_call.1} parent=1 // pred_check_branch
      %61 = sbr.rel (0) target = $region29
    $region28: #{tpu_custom_call.1} parent=1 // pred_region
      %63 = dma.done [#allocation7], 1024
    $region29: #{tpu_custom_call.1} parent=1 // pred_fallthru
      _
    // Predicated region
    $region30: #{tpu_custom_call.1} parent=1 // pred_check
      _
    $region31: #{tpu_custom_call.1} parent=1 // pred_check_branch
      %65 = sbr.rel (0) target = $region33
    $region32: #{tpu_custom_call.1} parent=1 // pred_region
      %67 = dma.done [#allocation7], 1024
    $region33: #{tpu_custom_call.1} parent=1 // pred_fallthru
      _
    %p68 = scmp.eq.s32.totalorder 0, 0
    // Predicated region
    $region34: #{tpu_custom_call.1} parent=1 // pred_check
      %p69 = pneg %p68
    $region35: #{tpu_custom_call.1} parent=1 // pred_check_branch
      %71 = sbr.rel (%p69) target = $region37
    $region36: #{tpu_custom_call.1} parent=1 // pred_region
      %v72 = vld [vmem:[#allocation3] sm:$0xf]
      %v73 = vld [vmem:[#allocation3 + $0x4] sm:$0xf]
      %v74 = vld [vmem:[#allocation6] sm:$0xf]
      %v75 = vld [vmem:[#allocation6 + $0x4] sm:$0xf]
      %v76 = vld [vmem:[#allocation6 + $0x8] sm:$0xf]
      %v77 = vld [vmem:[#allocation6 + $0xc] sm:$0xf]
      %v78 = vld [vmem:[#allocation6 + $0x10] sm:$0xf]
      %v79 = vld [vmem:[#allocation6 + $0x14] sm:$0xf]
      %v80 = vld [vmem:[#allocation6 + $0x18] sm:$0xf]
      %v81 = vld [vmem:[#allocation6 + $0x1c] sm:$0xf]
      %v82 = vld [vmem:[#allocation6 + $0x20] sm:$0xf]
      %v83 = vld [vmem:[#allocation6 + $0x24] sm:$0xf]
      %v84 = vld [vmem:[#allocation6 + $0x28] sm:$0xf]
      %v85 = vld [vmem:[#allocation6 + $0x2c] sm:$0xf]
      %v86 = vld [vmem:[#allocation6 + $0x30] sm:$0xf]
      %v87 = vld [vmem:[#allocation6 + $0x34] sm:$0xf]
      %v88 = vld [vmem:[#allocation6 + $0x38] sm:$0xf]
      %v89 = vld [vmem:[#allocation6 + $0x3c] sm:$0xf]
      %v90 = vld [vmem:[%s2] sm:$0x1]
      %v92 = vperm.slane %v90, 0
      %v96 = vunpack.c.l.b16 %v72
      %v97 = vunpack.c.l.b16 %v73
      %v98 = vpack.c.b16 %v97, %v96
      %v116 = vunpack.c.l.b16 %v74
      %v117 = vunpack.c.l.b16 %v75
      %v118 = vunpack.c.l.b16 %v76
      %v119 = vunpack.c.l.b16 %v77
      %v120 = vunpack.c.l.b16 %v78
      %v121 = vunpack.c.l.b16 %v79
      %v122 = vunpack.c.l.b16 %v80
      %v123 = vunpack.c.l.b16 %v81
      %v124 = vunpack.c.l.b16 %v82
      %v125 = vunpack.c.l.b16 %v83
      %v126 = vunpack.c.l.b16 %v84
      %v127 = vunpack.c.l.b16 %v85
      %v128 = vunpack.c.l.b16 %v86
      %v129 = vunpack.c.l.b16 %v87
      %v130 = vunpack.c.l.b16 %v88
      %v131 = vunpack.c.l.b16 %v89
      %v132 = vpack.c.b16 %v117, %v116
      %v133 = vpack.c.b16 %v119, %v118
      %v134 = vpack.c.b16 %v121, %v120
      %v135 = vpack.c.b16 %v123, %v122
      %v136 = vpack.c.b16 %v125, %v124
      %v137 = vpack.c.b16 %v127, %v126
      %v138 = vpack.c.b16 %v129, %v128
      %v139 = vpack.c.b16 %v131, %v130
      %148 = vmatpush.bf16.msra.mxu0 %v139
      %149 = vmatpush.bf16.msra.mxu0 %v138
      %150 = vmatpush.bf16.msra.mxu0 %v137
      %151 = vmatpush.bf16.msra.mxu0 %v136
      %152 = vmatpush.bf16.msra.mxu0 %v135
      %153 = vmatpush.bf16.msra.mxu0 %v134
      %154 = vmatpush.bf16.msra.mxu0 %v133
      %155 = vmatpush.bf16.msra.mxu0 %v132
      %156 = vmatmul.bf16.gmra.mxu0 %v98
      %v157 = vpop.f32.mrf.mxu0
      %v158 = vadd.f32 %v92, %v157
      %v159 = vpop.f32.mrf.mxu0
      %v160 = vadd.f32 %v92, %v159
      %161 = vdwg.mxu0
      %v162 = vmul.f32 %v158, %v158
      %v163 = vmul.f32 %v160, %v160
      %v164 = vmul.f32 %v158, %v162
      %v165 = vmul.f32 %v160, %v163
      %v166 = vmul.f32 %v164, 0.044715
      %v167 = vmul.f32 %v165, 0.044715
      %v168 = vadd.f32 %v158, %v166
      %v169 = vadd.f32 %v160, %v167
      %v170 = vmul.f32 %v168, 0.7978846
      %v171 = vmul.f32 %v169, 0.7978846
      %v172 = vtanh.pop %v170
      %v173 = vtanh.pop %v171
      %v174 = vadd.f32 %v172, 1.0
      %v175 = vadd.f32 %v173, 1.0
      %v176 = vmul.f32 %v174, 0.5
      %v177 = vmul.f32 %v175, 0.5
      %v178 = vmul.f32 %v158, %v176
      %v179 = vmul.f32 %v160, %v177
      %v180 = vpack.c.bf16 %v178, %v178
      %v181 = vpack.c.bf16 %v179, %v179
      %182 = vst [vmem:[#allocation2] sm:$0xf] %v180
      %183 = vst [vmem:[#allocation2 + $0x4] sm:$0xf] %v181
    $region37: #{tpu_custom_call.1} parent=1 // pred_fallthru
      _
    %v184 = vld [vmem:[#allocation2] sm:$0xf]
    %v185 = vld [vmem:[#allocation2 + $0x4] sm:$0xf]
    %v186 = vld [vmem:[#allocation8] sm:$0xf]
    %v187 = vld [vmem:[#allocation8 + $0x4] sm:$0xf]
    %v188 = vld [vmem:[#allocation8 + $0x8] sm:$0xf]
    %v189 = vld [vmem:[#allocation8 + $0xc] sm:$0xf]
    %v190 = vld [vmem:[#allocation8 + $0x10] sm:$0xf]
    %v191 = vld [vmem:[#allocation8 + $0x14] sm:$0xf]
    %v192 = vld [vmem:[#allocation8 + $0x18] sm:$0xf]
    %v193 = vld [vmem:[#allocation8 + $0x1c] sm:$0xf]
    %v194 = vld [vmem:[#allocation8 + $0x20] sm:$0xf]
    %v195 = vld [vmem:[#allocation8 + $0x24] sm:$0xf]
    %v196 = vld [vmem:[#allocation8 + $0x28] sm:$0xf]
    %v197 = vld [vmem:[#allocation8 + $0x2c] sm:$0xf]
    %v198 = vld [vmem:[#allocation8 + $0x30] sm:$0xf]
    %v199 = vld [vmem:[#allocation8 + $0x34] sm:$0xf]
    %v200 = vld [vmem:[#allocation8 + $0x38] sm:$0xf]
    %v201 = vld [vmem:[#allocation8 + $0x3c] sm:$0xf]
    %v202 = vld [vmem:[%s4] sm:$0x1]
    %v204 = vperm.slane %v202, 0
    %v208 = vunpack.c.l.b16 %v184
    %v209 = vunpack.c.l.b16 %v185
    %v210 = vpack.c.b16 %v209, %v208
    %v228 = vunpack.c.l.b16 %v186
    %v229 = vunpack.c.l.b16 %v187
    %v230 = vunpack.c.l.b16 %v188
    %v231 = vunpack.c.l.b16 %v189
    %v232 = vunpack.c.l.b16 %v190
    %v233 = vunpack.c.l.b16 %v191
    %v234 = vunpack.c.l.b16 %v192
    %v235 = vunpack.c.l.b16 %v193
    %v236 = vunpack.c.l.b16 %v194
    %v237 = vunpack.c.l.b16 %v195
    %v238 = vunpack.c.l.b16 %v196
    %v239 = vunpack.c.l.b16 %v197
    %v240 = vunpack.c.l.b16 %v198
    %v241 = vunpack.c.l.b16 %v199
    %v242 = vunpack.c.l.b16 %v200
    %v243 = vunpack.c.l.b16 %v201
    %v244 = vpack.c.b16 %v229, %v228
    %v245 = vpack.c.b16 %v231, %v230
    %v246 = vpack.c.b16 %v233, %v232
    %v247 = vpack.c.b16 %v235, %v234
    %v248 = vpack.c.b16 %v237, %v236
    %v249 = vpack.c.b16 %v239, %v238
    %v250 = vpack.c.b16 %v241, %v240
    %v251 = vpack.c.b16 %v243, %v242
    %260 = vmatpush.bf16.msra.mxu0 %v251
    %261 = vmatpush.bf16.msra.mxu0 %v250
    %262 = vmatpush.bf16.msra.mxu0 %v249
    %263 = vmatpush.bf16.msra.mxu0 %v248
    %264 = vmatpush.bf16.msra.mxu0 %v247
    %265 = vmatpush.bf16.msra.mxu0 %v246
    %266 = vmatpush.bf16.msra.mxu0 %v245
    %267 = vmatpush.bf16.msra.mxu0 %v244
    %268 = vmatmul.bf16.gmra.mxu0 %v210
    %v269 = vpop.f32.mrf.mxu0
    %v270 = vadd.f32 %v204, %v269
    %v271 = vpop.f32.mrf.mxu0
    %v272 = vadd.f32 %v204, %v271
    %273 = vdwg.mxu0
    %v274 = vpack.c.bf16 %v270, %v270
    %v275 = vpack.c.bf16 %v272, %v272
    %276 = vst [vmem:[#allocation9] sm:$0xf] %v274
    %277 = vst [vmem:[#allocation9 + $0x4] sm:$0xf] %v275
    // Predicated region
    $region38: #{tpu_custom_call.1} parent=1 // pred_check
      _
    $region39: #{tpu_custom_call.1} parent=1 // pred_check_branch
      %279 = sbr.rel (0) target = $region41
    $region40: #{tpu_custom_call.1} parent=1 // pred_region
      %281 = vsyncadd [#allocation5], 0
      %s282 = sshll.u32 [#allocation9], 4
      %s283 = int_to_ptr.vmem [resolvable:$true] %s282
      %s284 = sshll.u32 %s5, 4
      %s285 = int_to_ptr.hbm [resolvable:$true] %s284
      %290 = dma.vmem_to_hbm [thread:$0]  %s283, 128, %s285, [#allocation5], 64, 64, 4
    $region41: #{tpu_custom_call.1} parent=1 // pred_fallthru
      _
    // Predicated region
    $region42: #{tpu_custom_call.1} parent=1 // pred_check
      _
    $region43: #{tpu_custom_call.1} parent=1 // pred_check_branch
      %292 = sbr.rel (0) target = $region45
    $region44: #{tpu_custom_call.1} parent=1 // pred_region
      %294 = dma.done [#allocation5], 128
    $region45: #{tpu_custom_call.1} parent=1 // pred_fallthru
      _
    %295 = vsyncpa [#allocation4], 1
    %296 = vsyncpa [#allocation7], 1
    %297 = vsyncpa [#allocation5], 1

</llo_original>
